<compile_context>
chip_gen: v7x
topology: tpu7x:2x2x1
jax: 0.10.0
libtpu: 0.0.40
codegen_flags: <defaults>
</compile_context>

<pallas_src>
import functools

import jax
import jax.numpy as jnp
from jax.experimental import pallas as pl
from jax.experimental.pallas import tpu as pltpu


def _hinton_kl_kernel(t_ref, s_ref, out_ref, *, temperature):
    """t_ref / s_ref: (C, N) gathered predictions, N = B*K on the lane axis."""
    T = temperature
    inv_T = 1.0 / T

    # Single lane-dense cast per input (no-op for f32 inputs).
    t = t_ref[...].astype(jnp.float32)   # (C, N)
    s = s_ref[...].astype(jnp.float32)   # (C, N)

    def softmax_c(x):
        # Softmax over channels (sublane axis 0); reciprocal is taken on the
        # small (1, N) row sum and broadcast-multiplied (cheap VPU work).
        m = jnp.max(x, axis=0, keepdims=True)           # (1, N)
        e = jnp.exp(x - m)                              # (C, N)
        denom = jnp.sum(e, axis=0, keepdims=True)       # (1, N)
        return e * (1.0 / denom)

    def log_softmax_c(x):
        m = jnp.max(x, axis=0, keepdims=True)
        xs = x - m
        return xs - jnp.log(jnp.sum(jnp.exp(xs), axis=0, keepdims=True))

    # forward()'s `softmax=True` branch:
    t1 = softmax_c(t * inv_T)            # F.softmax(teacher_pred / T, dim=2)
    s1 = log_softmax_c(s * inv_T)        # F.log_softmax(student_pred / T, dim=2)

    # forward() applies softmax / log_softmax AGAIN inside the loss expression
    # (PyTorch quirk reproduced verbatim).  log-softmax identity: instead of
    # t2 = softmax(...) followed by an extra per-element log(t2), compute the
    # log-probs once and exponentiate them.
    log_t2 = log_softmax_c(t1 * inv_T)   # log F.softmax(teacher_pred / T, dim=2)
    t2 = jnp.exp(log_t2)                 # F.softmax(teacher_pred / T, dim=2)
    s2 = log_softmax_c(s1 * inv_T)       # F.log_softmax(student_pred / T, dim=2)

    # F.kl_div(input=log-probs, target=probs): target * (log(target) - input)
    kl = t2 * (log_t2 - s2)

    # Single scalar write; no per-grid-step accumulation.
    out_ref[...] = jnp.sum(jnp.sum(kl, axis=0, keepdims=True),
                           axis=1, keepdims=True)


def _gather_feat_cn(feat, ind):
    """feat: (B, C, H, W) NCHW; ind: (B, K) flat indices into H*W.

    Gathers on the (B, C, H*W) view (avoids materializing the full NHWC copy
    of the feature map) and returns a (C, B*K) slab: channels on sublanes,
    B*K on the 128-wide lane axis.
    """
    B, C, H, W = feat.shape
    K = ind.shape[1]
    f = feat.reshape(B, C, H * W)                                   # view
    g = jnp.take_along_axis(f, ind[:, None, :].astype(jnp.int32),
                            axis=2)                                 # (B, C, K)
    return jnp.transpose(g, (1, 0, 2)).reshape(C, B * K)            # (C, B*K)


def partial_hinton_loss(teacher, student, ind, lambda_=0.5, T=4.0):
    """Pallas implementation of PartialHintonLoss.forward
    (default sigmoid=False, softmax=True path).  `lambda_` is unused by the
    forward pass, as in the PyTorch module."""
    del lambda_  # not used in forward()
    B, C, H, W = teacher.shape
    K = ind.shape[1]
    N = B * K

    # Gather without the full NHWC transpose (dominant end-to-end cost before).
    t_cn = _gather_feat_cn(teacher, ind)   # (C, N)
    s_cn = _gather_feat_cn(student, ind)   # (C, N)

    # Whole tensor as a single block: at realistic CenterNet sizes
    # (e.g. B=32, K=128, C=80 -> ~1.3 MB f32 per input) this fits trivially in
    # VMEM on v5e/v6e/v7x, so one grid step removes all per-step pipeline
    # overhead.  If B*K ever grows huge, tile the lane axis in >=512-lane
    # blocks and emit per-tile partial sums (mark that axis "parallel" for
    # v7x's two TensorCores).
    kl_sum = pl.pallas_call(
        functools.partial(_hinton_kl_kernel, temperature=float(T)),
        out_shape=jax.ShapeDtypeStruct((1, 1), jnp.float32),
        grid=(1,),
        in_specs=[
            pl.BlockSpec((C, N), lambda i: (0, 0)),
            pl.BlockSpec((C, N), lambda i: (0, 0)),
        ],
        out_specs=pl.BlockSpec((1, 1), lambda i: (0, 0)),
        compiler_params=pltpu.CompilerParams(
            dimension_semantics=("arbitrary",)),
    )(t_cn, s_cn)

    # reduction='batchmean' divides by input.size(0) == B; then * T**2.
    return kl_sum[0, 0] / B * (T ** 2)


# ----------------------------------------------------------------------------
# Pure-JAX reference mirroring the PyTorch forward exactly (original gather
# path included, so it also validates the rewritten gather).
# ----------------------------------------------------------------------------
def _transpose_and_gather_feat_ref(feat, ind):
    B, C, H, W = feat.shape
    f = jnp.transpose(feat, (0, 2, 3, 1)).reshape(B, H * W, C)
    return jnp.take_along_axis(f, ind[:, :, None], axis=1)


def _reference_loss(teacher, student, ind, T=4.0):
    B = teacher.shape[0]
    tp = _transpose_and_gather_feat_ref(teacher, ind)
    sp = _transpose_and_gather_feat_ref(student, ind)
    t1 = jax.nn.softmax(tp / T, axis=2)
    s1 = jax.nn.log_softmax(sp / T, axis=2)
    t2 = jax.nn.softmax(t1 / T, axis=2)
    s2 = jax.nn.log_softmax(s1 / T, axis=2)
    kl = t2 * (jnp.log(t2) - s2)
    return jnp.sum(kl) / B * (T ** 2)


if __name__ == "__main__":
    key = jax.random.PRNGKey(0)
    k1, k2, k3 = jax.random.split(key, 3)

    B, C, H, W = 2, 4, 16, 16
    K = 8  # number of gathered object-center indices per batch element

    teacher = jax.random.normal(k1, (B, C, H, W), dtype=jnp.float32)
    student = jax.random.normal(k2, (B, C, H, W), dtype=jnp.float32)
    ind = jax.random.randint(k3, (B, K), 0, H * W, dtype=jnp.int32)

    loss = jax.block_until_ready(
        partial_hinton_loss(teacher, student, ind, lambda_=0.5, T=4.0))
    ref = jax.block_until_ready(_reference_loss(teacher, student, ind, T=4.0))

    # Tolerance accounts for the (mathematically equivalent) log-softmax
    # reformulation vs the reference's softmax-then-log.
    assert jnp.allclose(loss, ref, rtol=5e-3, atol=1e-6), (loss, ref)

    print("KERNEL_OK")
</pallas_src>

<mosaic_0001>
module attributes {stable_mosaic.version = 11 : i64} {
  func.func @_hinton_kl_kernel(%arg0: i32, %arg1: memref<4x16xf32, #tpu.memory_space<vmem>>, %arg2: memref<4x16xf32, #tpu.memory_space<vmem>>, %arg3: memref<1x1xf32, #tpu.memory_space<vmem>>) attributes {dimension_semantics = [#tpu.dimension_semantics<arbitrary>], iteration_bounds = array<i64: 1>, scalar_prefetch = 0 : i64, scratch_operands = 0 : i64, tpu.core_type = #tpu.core_type<tc>, window_params = [{pipeline_mode = #tpu.pipeline_mode<synchronous>, transform_indices = @transform_0, window_bounds = array<i64: 4, 16>}, {pipeline_mode = #tpu.pipeline_mode<synchronous>, transform_indices = @transform_1, window_bounds = array<i64: 4, 16>}, {pipeline_mode = #tpu.pipeline_mode<synchronous>, transform_indices = @transform_2, window_bounds = array<i64: 1, 1>}]} {
    %c0 = arith.constant 0 : index
    %c0_0 = arith.constant 0 : index
    %0 = vector.load %arg1[%c0, %c0_0] : memref<4x16xf32, #tpu.memory_space<vmem>>, vector<4x16xf32>
    %c0_1 = arith.constant 0 : index
    %c0_2 = arith.constant 0 : index
    %1 = vector.load %arg2[%c0_1, %c0_2] : memref<4x16xf32, #tpu.memory_space<vmem>>, vector<4x16xf32>
    %cst = arith.constant 2.500000e-01 : f32
    %2 = vector.broadcast %cst : f32 to vector<4x16xf32>
    %3 = arith.mulf %0, %2 : vector<4x16xf32>
    %cst_3 = arith.constant dense<0xFF800000> : vector<16xf32>
    %4 = vector.multi_reduction <maximumf>, %3, %cst_3 [0] : vector<4x16xf32> to vector<16xf32>
    %5 = vector.shape_cast %4 : vector<16xf32> to vector<1x16xf32>
    %6 = vector.broadcast %5 : vector<1x16xf32> to vector<4x16xf32>
    %7 = arith.subf %3, %6 : vector<4x16xf32>
    %8 = math.exp %7 : vector<4x16xf32>
    %cst_4 = arith.constant dense<0.000000e+00> : vector<16xf32>
    %9 = vector.multi_reduction <add>, %8, %cst_4 [0] : vector<4x16xf32> to vector<16xf32>
    %10 = vector.shape_cast %9 : vector<16xf32> to vector<1x16xf32>
    %cst_5 = arith.constant 1.000000e+00 : f32
    %11 = vector.broadcast %cst_5 : f32 to vector<1x16xf32>
    %12 = arith.divf %11, %10 : vector<1x16xf32>
    %13 = vector.broadcast %12 : vector<1x16xf32> to vector<4x16xf32>
    %14 = arith.mulf %8, %13 : vector<4x16xf32>
    %cst_6 = arith.constant 2.500000e-01 : f32
    %15 = vector.broadcast %cst_6 : f32 to vector<4x16xf32>
    %16 = arith.mulf %1, %15 : vector<4x16xf32>
    %cst_7 = arith.constant dense<0xFF800000> : vector<16xf32>
    %17 = vector.multi_reduction <maximumf>, %16, %cst_7 [0] : vector<4x16xf32> to vector<16xf32>
    %18 = vector.shape_cast %17 : vector<16xf32> to vector<1x16xf32>
    %19 = vector.broadcast %18 : vector<1x16xf32> to vector<4x16xf32>
    %20 = arith.subf %16, %19 : vector<4x16xf32>
    %21 = math.exp %20 : vector<4x16xf32>
    %cst_8 = arith.constant dense<0.000000e+00> : vector<16xf32>
    %22 = vector.multi_reduction <add>, %21, %cst_8 [0] : vector<4x16xf32> to vector<16xf32>
    %23 = vector.shape_cast %22 : vector<16xf32> to vector<1x16xf32>
    %24 = math.log %23 : vector<1x16xf32>
    %25 = vector.broadcast %24 : vector<1x16xf32> to vector<4x16xf32>
    %26 = arith.subf %20, %25 : vector<4x16xf32>
    %cst_9 = arith.constant 2.500000e-01 : f32
    %27 = vector.broadcast %cst_9 : f32 to vector<4x16xf32>
    %28 = arith.mulf %14, %27 : vector<4x16xf32>
    %cst_10 = arith.constant dense<0xFF800000> : vector<16xf32>
    %29 = vector.multi_reduction <maximumf>, %28, %cst_10 [0] : vector<4x16xf32> to vector<16xf32>
    %30 = vector.shape_cast %29 : vector<16xf32> to vector<1x16xf32>
    %31 = vector.broadcast %30 : vector<1x16xf32> to vector<4x16xf32>
    %32 = arith.subf %28, %31 : vector<4x16xf32>
    %33 = math.exp %32 : vector<4x16xf32>
    %cst_11 = arith.constant dense<0.000000e+00> : vector<16xf32>
    %34 = vector.multi_reduction <add>, %33, %cst_11 [0] : vector<4x16xf32> to vector<16xf32>
    %35 = vector.shape_cast %34 : vector<16xf32> to vector<1x16xf32>
    %36 = math.log %35 : vector<1x16xf32>
    %37 = vector.broadcast %36 : vector<1x16xf32> to vector<4x16xf32>
    %38 = arith.subf %32, %37 : vector<4x16xf32>
    %39 = math.exp %38 : vector<4x16xf32>
    %cst_12 = arith.constant 2.500000e-01 : f32
    %40 = vector.broadcast %cst_12 : f32 to vector<4x16xf32>
    %41 = arith.mulf %26, %40 : vector<4x16xf32>
    %cst_13 = arith.constant dense<0xFF800000> : vector<16xf32>
    %42 = vector.multi_reduction <maximumf>, %41, %cst_13 [0] : vector<4x16xf32> to vector<16xf32>
    %43 = vector.shape_cast %42 : vector<16xf32> to vector<1x16xf32>
    %44 = vector.broadcast %43 : vector<1x16xf32> to vector<4x16xf32>
    %45 = arith.subf %41, %44 : vector<4x16xf32>
    %46 = math.exp %45 : vector<4x16xf32>
    %cst_14 = arith.constant dense<0.000000e+00> : vector<16xf32>
    %47 = vector.multi_reduction <add>, %46, %cst_14 [0] : vector<4x16xf32> to vector<16xf32>
    %48 = vector.shape_cast %47 : vector<16xf32> to vector<1x16xf32>
    %49 = math.log %48 : vector<1x16xf32>
    %50 = vector.broadcast %49 : vector<1x16xf32> to vector<4x16xf32>
    %51 = arith.subf %45, %50 : vector<4x16xf32>
    %52 = arith.subf %38, %51 : vector<4x16xf32>
    %53 = arith.mulf %39, %52 : vector<4x16xf32>
    %cst_15 = arith.constant dense<0.000000e+00> : vector<16xf32>
    %54 = vector.multi_reduction <add>, %53, %cst_15 [0] : vector<4x16xf32> to vector<16xf32>
    %55 = vector.shape_cast %54 : vector<16xf32> to vector<1x16xf32>
    %cst_16 = arith.constant dense<0.000000e+00> : vector<1xf32>
    %56 = vector.multi_reduction <add>, %55, %cst_16 [1] : vector<1x16xf32> to vector<1xf32>
    %57 = vector.shape_cast %56 : vector<1xf32> to vector<1x1xf32>
    %c0_17 = arith.constant 0 : index
    %c0_18 = arith.constant 0 : index
    %58 = vector.load %arg3[%c0_17, %c0_18] : memref<1x1xf32, #tpu.memory_space<vmem>>, vector<1x1xf32>
    tpu.vector_store %arg3[%c0_17, %c0_18], %57 {strides = array<i32>} : memref<1x1xf32, #tpu.memory_space<vmem>>, vector<1x1xf32>,
    return
  }
  func.func @transform_0(%arg0: i32) -> (i32, i32) {
    %c0_i32 = arith.constant 0 : i32
    %c0_i32_0 = arith.constant 0 : i32
    %c0_i32_1 = arith.constant 0 : i32
    return %c0_i32, %c0_i32_0 : i32, i32
  }
  func.func @transform_1(%arg0: i32) -> (i32, i32) {
    %c0_i32 = arith.constant 0 : i32
    %c0_i32_0 = arith.constant 0 : i32
    %c0_i32_1 = arith.constant 0 : i32
    return %c0_i32, %c0_i32_0 : i32, i32
  }
  func.func @transform_2(%arg0: i32) -> (i32, i32) {
    %c0_i32 = arith.constant 0 : i32
    %c0_i32_0 = arith.constant 0 : i32
    %c0_i32_1 = arith.constant 0 : i32
    return %c0_i32, %c0_i32_0 : i32, i32
  }
}

</mosaic_0001>

<llo_original>
// kernel: tpu_custom_call.1
$region0: #{tpu_custom_call.1}
  #allocation0 [shape = 'u32[]', space=smem, size = 0x4, offset = 0x4, fixed_abs, tag = 'smem constant byte address 0x4 - core index']
  #allocation1 [shape = 'u32[144,128]{1,0:T(1,128)}', space=vmem, size = 0x12000, scoped, tag = 'internal scratch']
  %s0 = inlined_call_operand.hbm [shape: f32[4,16], index: 0, kind: input, shape index: {}]
  %s1 = inlined_call_operand.hbm [shape: f32[4,16], index: 1, kind: input, shape index: {}]
  %s2 = inlined_call_operand.hbm [shape: f32[1,1], index: 2, kind: output, shape index: {}]
  %s3 = sld [smem:[#allocation0]]
  $region26: #{tpu_custom_call.1} parent=0
    _
  %s5 = ssub.s32 1, %s3
  %s6 = scalar_select 0, %s5, %s3
  $region1: #{tpu_custom_call.1} parent=0
    #allocation2 [shape = 'u8[2048]{0}', space=vmem, size = 0x800, scoped, tag = 'input window, operand 0, single buffered']
    #allocation3 [shape = 's32[1]{0}', space=sflag, size = 0x4, scoped, tag = 'scoped memory for tpu_custom_call.1']
    #allocation4 [shape = 's32[1]{0}', space=sflag, size = 0x4, scoped, tag = 'scoped memory for tpu_custom_call.1']
    #allocation5 [shape = 'u8[2048]{0}', space=vmem, size = 0x800, scoped, tag = 'input window, operand 1, single buffered']
    #allocation6 [shape = 's32[1]{0}', space=sflag, size = 0x4, scoped, tag = 'scoped memory for tpu_custom_call.1']
    #allocation7 [shape = 'u8[512]{0}', space=vmem, size = 0x400, scoped, tag = 'output window, operand 0, single buffered']
    %7 = vsyncpa [#allocation3], 0
    %8 = vsyncpa [#allocation6], 0
    %9 = vsyncpa [#allocation4], 0
    // Predicated region
    $region2: #{tpu_custom_call.1} parent=1 // pred_check
      _
    $region3: #{tpu_custom_call.1} parent=1 // pred_check_branch
      %11 = sbr.rel (0) target = $region5
    $region4: #{tpu_custom_call.1} parent=1 // pred_region
      %s13 = ssub.s32 64, 64
      %14 = vsyncadd [#allocation3], %s13
      %s16 = sshll.u32 [#allocation2], 4
      %s17 = int_to_ptr.vmem [resolvable:$true] %s16
      %19 = dma.hbm_to_vmem [thread:$0]  %s0, 64, %s17, [#allocation3]
    $region5: #{tpu_custom_call.1} parent=1 // pred_fallthru
      _
    // Predicated region
    $region6: #{tpu_custom_call.1} parent=1 // pred_check
      _
    $region7: #{tpu_custom_call.1} parent=1 // pred_check_branch
      %21 = sbr.rel (0) target = $region9
    $region8: #{tpu_custom_call.1} parent=1 // pred_region
      %s23 = ssub.s32 64, 64
      %24 = vsyncadd [#allocation6], %s23
      %s26 = sshll.u32 [#allocation5], 4
      %s27 = int_to_ptr.vmem [resolvable:$true] %s26
      %29 = dma.hbm_to_vmem [thread:$0]  %s1, 64, %s27, [#allocation6]
    $region9: #{tpu_custom_call.1} parent=1 // pred_fallthru
      _
    // Predicated region
    $region10: #{tpu_custom_call.1} parent=1 // pred_check
      _
    $region11: #{tpu_custom_call.1} parent=1 // pred_check_branch
      %31 = sbr.rel (0) target = $region13
    $region12: #{tpu_custom_call.1} parent=1 // pred_region
      %32 = dma.done [#allocation3], 64
    $region13: #{tpu_custom_call.1} parent=1 // pred_fallthru
      _
    // Predicated region
    $region14: #{tpu_custom_call.1} parent=1 // pred_check
      _
    $region15: #{tpu_custom_call.1} parent=1 // pred_check_branch
      %34 = sbr.rel (0) target = $region17
    $region16: #{tpu_custom_call.1} parent=1 // pred_region
      %35 = dma.done [#allocation6], 64
    $region17: #{tpu_custom_call.1} parent=1 // pred_fallthru
      _
    %v36 = vld [vmem:[#allocation2] sm:$0xf]
    %v37 = vld [vmem:[#allocation5] sm:$0xf]
    %v38 = vmul.f32 %v36, 0.25
    %vm39 = vcmask 125952
    %v40 = vsel %vm39, %v38, -inf
    %v41 = vrot.slane %v40, 4
    %v42 = vmax.f32 %v40, %v41
    %v43 = vrot.slane %v42, 2
    %v44 = vmax.f32 %v42, %v43
    %v45 = vrot.slane %v44, 1
    %v46 = vmax.f32 %v44, %v45
    %v47 = vsub.f32 %v38, %v46
    %v48 = vmul.f32 %v47, 1.442695
    %v49 = vpow.pop %v48
    %v50 = vsel %vm39, %v49, 0.0
    %v51 = vrot.slane %v50, 4
    %v52 = vadd.f32 %v50, %v51
    %v53 = vrot.slane %v52, 2
    %v54 = vadd.f32 %v52, %v53
    %v55 = vrot.slane %v54, 1
    %v56 = vadd.f32 %v54, %v55
    %v57 = vrcp.pop %v56
    %v58 = vmul.f32 1.0, %v57
    %v59 = vmul.f32 %v49, %v58
    %v60 = vmul.f32 %v37, 0.25
    %v61 = vsel %vm39, %v60, -inf
    %v62 = vrot.slane %v61, 4
    %v63 = vmax.f32 %v61, %v62
    %v64 = vrot.slane %v63, 2
    %v65 = vmax.f32 %v63, %v64
    %v66 = vrot.slane %v65, 1
    %v67 = vmax.f32 %v65, %v66
    %v68 = vsub.f32 %v60, %v67
    %v69 = vmul.f32 %v68, 1.442695
    %v70 = vpow.pop %v69
    %v71 = vsel %vm39, %v70, 0.0
    %v72 = vrot.slane %v71, 4
    %v73 = vadd.f32 %v71, %v72
    %v74 = vrot.slane %v73, 2
    %v75 = vadd.f32 %v73, %v74
    %v76 = vrot.slane %v75, 1
    %v77 = vadd.f32 %v75, %v76
    %v78 = vlog2.pop %v77
    %v79 = vmul.f32 %v78, 0.6931472
    %v80 = vsub.f32 %v68, %v79
    %v81 = vmul.f32 %v59, 0.25
    %v82 = vsel %vm39, %v81, -inf
    %v83 = vrot.slane %v82, 4
    %v84 = vmax.f32 %v82, %v83
    %v85 = vrot.slane %v84, 2
    %v86 = vmax.f32 %v84, %v85
    %v87 = vrot.slane %v86, 1
    %v88 = vmax.f32 %v86, %v87
    %v89 = vsub.f32 %v81, %v88
    %v90 = vmul.f32 %v89, 1.442695
    %v91 = vpow.pop %v90
    %v92 = vsel %vm39, %v91, 0.0
    %v93 = vrot.slane %v92, 4
    %v94 = vadd.f32 %v92, %v93
    %v95 = vrot.slane %v94, 2
    %v96 = vadd.f32 %v94, %v95
    %v97 = vrot.slane %v96, 1
    %v98 = vadd.f32 %v96, %v97
    %v99 = vlog2.pop %v98
    %v100 = vmul.f32 %v99, 0.6931472
    %v101 = vsub.f32 %v89, %v100
    %v102 = vmul.f32 %v101, 1.442695
    %v103 = vpow.pop %v102
    %v104 = vmul.f32 %v80, 0.25
    %v105 = vsel %vm39, %v104, -inf
    %v106 = vrot.slane %v105, 4
    %v107 = vmax.f32 %v105, %v106
    %v108 = vrot.slane %v107, 2
    %v109 = vmax.f32 %v107, %v108
    %v110 = vrot.slane %v109, 1
    %v111 = vmax.f32 %v109, %v110
    %v112 = vsub.f32 %v104, %v111
    %v113 = vmul.f32 %v112, 1.442695
    %v114 = vpow.pop %v113
    %v115 = vsel %vm39, %v114, 0.0
    %v116 = vrot.slane %v115, 4
    %v117 = vadd.f32 %v115, %v116
    %v118 = vrot.slane %v117, 2
    %v119 = vadd.f32 %v117, %v118
    %v120 = vrot.slane %v119, 1
    %v121 = vadd.f32 %v119, %v120
    %v122 = vlog2.pop %v121
    %v123 = vmul.f32 %v122, 0.6931472
    %v124 = vsub.f32 %v112, %v123
    %v125 = vsub.f32 %v101, %v124
    %v126 = vmul.f32 %v103, %v125
    %v127 = vsel %vm39, %v126, 0.0
    %v128 = vrot.slane %v127, 4
    %v129 = vadd.f32 %v127, %v128
    %v130 = vrot.slane %v129, 2
    %v131 = vadd.f32 %v129, %v130
    %v132 = vrot.slane %v131, 1
    %v133 = vadd.f32 %v131, %v132
    %vm134 = vcmask 130048
    %v135 = vsel %vm134, %v133, 0.0
    %136 = vadd.xlane.f32.xlu0 %v135
    %v137 = vpop.xlane.xlu0 %136
    %vm138 = vcmask 0
    %139 = vst.msk [vmem:[#allocation7] sm:$0x1] %vm138, %v137
    // Predicated region
    $region18: #{tpu_custom_call.1} parent=1 // pred_check
      _
    $region19: #{tpu_custom_call.1} parent=1 // pred_check_branch
      %141 = sbr.rel (0) target = $region21
    $region20: #{tpu_custom_call.1} parent=1 // pred_region
      %s143 = ssub.s32 16, 16
      %144 = vsyncadd [#allocation4], %s143
      %s146 = sshll.u32 [#allocation7], 4
      %s147 = int_to_ptr.vmem [resolvable:$true] %s146
      %149 = dma.vmem_to_hbm [thread:$0]  %s147, 16, %s2, [#allocation4]
    $region21: #{tpu_custom_call.1} parent=1 // pred_fallthru
      _
    // Predicated region
    $region22: #{tpu_custom_call.1} parent=1 // pred_check
      _
    $region23: #{tpu_custom_call.1} parent=1 // pred_check_branch
      %151 = sbr.rel (0) target = $region25
    $region24: #{tpu_custom_call.1} parent=1 // pred_region
      %152 = dma.done [#allocation4], 16
    $region25: #{tpu_custom_call.1} parent=1 // pred_fallthru
      _
    %153 = vsyncpa [#allocation3], 1
    %154 = vsyncpa [#allocation6], 1
    %155 = vsyncpa [#allocation4], 1

</llo_original>
